<compile_context>
chip_gen: v7x
topology: tpu7x:2x2x1
jax: 0.10.0
libtpu: 0.0.40
codegen_flags: <defaults>
</compile_context>

<pallas_src>
import functools

import jax
import jax.numpy as jnp
from jax import lax
from jax.experimental import pallas as pl
from jax.experimental.pallas import tpu as pltpu


def _vq_kernel(z_ref, emb_d_ref, emb_ref, zq_ref, idx_ref, *, k_chunk):
    """One row-tile of vector quantization.

    z_ref:     (TB, D+1) bf16  -- rows are [-z | 1]          (pipelined)
    emb_d_ref: (K,  D+1) bf16  -- rows are [e  | 0.5*||e||^2] (resident)
    emb_ref:   (K,  D)   f32   -- exact codebook for the gather (resident)
    zq_ref:    (TB, D)   f32
    idx_ref:   (1, 1, TB) int32 (lane-dense indices)
    """
    z_aug = z_ref[...]                                  # (TB, D+1) bf16
    tb = z_aug.shape[0]
    K = emb_d_ref.shape[0]
    D = emb_ref.shape[1]

    # ---- Pass 1: chunked bf16 half-distances (MXU) + running argmin ---------
    # half_dist[k, b] = 0.5*||e_k||^2 - <z_b, e_k>   (||z||^2 dropped: constant
    # per row, cannot change the argmin).
    run_min = jnp.full((1, tb), jnp.inf, dtype=jnp.float32)
    run_idx = jnp.zeros((1, tb), dtype=jnp.int32)
    for c0 in range(0, K, k_chunk):
        kc = min(k_chunk, K - c0)
        dist = lax.dot_general(
            emb_d_ref[c0:c0 + kc, :], z_aug,
            (((1,), (1,)), ((), ())),
            preferred_element_type=jnp.float32)         # (kc, TB) f32
        c_min = jnp.min(dist, axis=0, keepdims=True)    # (1, TB)
        ids = lax.broadcasted_iota(jnp.int32, (kc, tb), 0) + c0
        # First occurrence wins within the chunk (torch.argmin semantics).
        c_idx = jnp.min(jnp.where(dist == c_min, ids, K),
                        axis=0, keepdims=True)          # (1, TB)
        better = c_min < run_min                        # strict: earlier chunk wins ties
        run_idx = jnp.where(better, c_idx, run_idx)
        run_min = jnp.minimum(run_min, c_min)

    # ---- Pass 2: chunked exact one-hot gather (f32 MXU) ---------------------
    zq = jnp.zeros((tb, D), dtype=jnp.float32)
    for c0 in range(0, K, k_chunk):
        kc = min(k_chunk, K - c0)
        ids = lax.broadcasted_iota(jnp.int32, (kc, tb), 0) + c0
        one_hot = jnp.where(ids == run_idx, 1.0, 0.0)   # (kc, TB) f32 directly
        zq = zq + lax.dot_general(
            one_hot, emb_ref[c0:c0 + kc, :],
            (((0,), (0,)), ((), ())),
            preferred_element_type=jnp.float32)         # (TB, D)

    zq_ref[...] = zq
    idx_ref[...] = run_idx.reshape(1, 1, tb)


def vector_quantize(z_e, embeddings, commitment_cost=0.1, *,
                    tile_rows=None, k_chunk=1024):
    """Forward pass of VectorQuantizer.

    z_e: (B, D) encoder outputs; embeddings: (K, D) codebook.
    Returns (z_q (B, D) f32, loss scalar f32, encoding_indices (B, 1) int32).
    """
    B, D = z_e.shape
    K, D2 = embeddings.shape
    assert D == D2, "latent dim mismatch"

    z_e = z_e.astype(jnp.float32)
    emb = embeddings.astype(jnp.float32)

    # Distance-side operands in bf16 with 0.5*||e||^2 folded in as one extra
    # column; the gather-side codebook stays f32 so z_q is exact.
    e_sq_half = 0.5 * jnp.sum(emb * emb, axis=1, keepdims=True)              # (K, 1)
    emb_d = jnp.concatenate([emb, e_sq_half], axis=1).astype(jnp.bfloat16)   # (K, D+1)
    z_aug = jnp.concatenate([-z_e, jnp.ones((B, 1), jnp.float32)],
                            axis=1).astype(jnp.bfloat16)                     # (B, D+1)

    # Per-generation sizing: bigger row tiles on v5e/v6e (128 MiB VMEM),
    # conservative on v7x (64 MiB per TensorCore).
    try:
        phys_vmem = int(pltpu.get_tpu_info().vmem_capacity_bytes)
    except Exception:   # info unavailable -> assume the smallest (v7x per-TC)
        phys_vmem = 64 << 20
    if tile_rows is None:
        tile_rows = 512 if phys_vmem >= (96 << 20) else 256
    tile_rows = max(8, (int(tile_rows) // 8) * 8)

    # Row tile: full array when B is small (no padding/masking); otherwise
    # tile_rows rows with Pallas handling the ragged last block (its garbage
    # rows only produce dropped out-of-bounds writes).  num_tiles >= 2 for
    # large B so "parallel" can split the grid across v7x's two TensorCores.
    tb = B if B <= tile_rows else tile_rows
    num_tiles = (B + tb - 1) // tb
    kc = max(8, min(int(k_chunk), K))
    d1 = D + 1

    # VMEM budget: resident codebooks (ideally x1), double-buffered row tiles,
    # (kc, TB) in-kernel temporaries.  Never drop below the typical 32 MiB
    # default; cap at 3/4 of physical VMEM.
    vmem_est = (2 * (K * d1 * 2 + K * D * 4)                 # resident (x2 worst case)
                + 2 * (tb * d1 * 2 + tb * D * 4 + tb * 4)    # pipelined row tiles
                + 4 * kc * tb * 4                            # (kc, TB) temporaries
                + (2 << 20))                                 # headroom
    vmem_limit = int(min(phys_vmem * 3 // 4, max(vmem_est, 32 << 20)))

    kernel = functools.partial(_vq_kernel, k_chunk=kc)

    def _run(single_buffer_resident):
        resident = ({"pipeline_mode": pl.Buffered(1)}
                    if single_buffer_resident else {})
        return pl.pallas_call(
            kernel,
            grid=(num_tiles,),
            in_specs=[
                # Row tile (double-buffered by default; sweep pl.Buffered(3)
                # if DMA latency is exposed at tiny D/K).
                pl.BlockSpec((tb, d1), lambda i: (i, 0)),
                # Resident bf16 codebook + folded norms.
                pl.BlockSpec((K, d1), lambda i: (0, 0), **resident),
                # Resident f32 codebook for the exact gather.
                pl.BlockSpec((K, D), lambda i: (0, 0), **resident),
            ],
            out_specs=[
                pl.BlockSpec((tb, D), lambda i: (i, 0)),        # z_q rows
                pl.BlockSpec((1, 1, tb), lambda i: (i, 0, 0)),  # lane-dense idx
            ],
            out_shape=(
                jax.ShapeDtypeStruct((B, D), jnp.float32),
                jax.ShapeDtypeStruct((num_tiles, 1, tb), jnp.int32),
            ),
            compiler_params=pltpu.CompilerParams(
                dimension_semantics=("parallel",),
                vmem_limit_bytes=vmem_limit,
            ),
        )(z_aug, emb_d, emb)

    try:
        # Single-buffer the resident codebook (halves its VMEM footprint —
        # important on v7x's 64 MiB per-TC VMEM).
        z_q, idx3 = _run(True)
    except Exception:
        # Fallback for JAX versions that reject pipeline_mode=pl.Buffered(1).
        z_q, idx3 = _run(False)

    idx = idx3.reshape(-1)[:B].reshape(B, 1)

    # VQ loss in the wrapper from the exact z_q: forward value of
    # mse(z_q.detach(), z_e) + c * mse(z_e.detach(), z_q) == (1 + c) * mse.
    mse = jnp.mean(jnp.square(z_q - z_e))
    loss = (1.0 + commitment_cost) * mse

    # TODO(synk): straight-through estimator (z_e + (z_q - z_e).detach()) and
    # the detach() split of the loss only affect gradients, not this forward.
    return z_q, loss, idx


# ----------------------------- self-test harness -----------------------------

def _matched_reference(z_e, emb, commitment_cost):
    """Pure-JAX reference using the same bf16 rounding of the distance-side
    operands as the kernel (so near-tie argmins are compared apples-to-apples);
    gather and loss are exact f32."""
    z_e = z_e.astype(jnp.float32)
    emb = emb.astype(jnp.float32)
    emb_b = emb.astype(jnp.bfloat16).astype(jnp.float32)
    z_b = z_e.astype(jnp.bfloat16).astype(jnp.float32)
    e_half = (0.5 * jnp.sum(emb * emb, axis=1)
              ).astype(jnp.bfloat16).astype(jnp.float32)
    half_dist = e_half[None, :] - z_b @ emb_b.T            # (B, K)
    idx = jnp.argmin(half_dist, axis=-1)
    z_q = emb[idx]
    mse = jnp.mean((z_q - z_e) ** 2)
    return z_q, (1.0 + commitment_cost) * mse, idx[:, None].astype(jnp.int32), half_dist


def _check(name, z_e, embeddings, commitment_cost, z_q, loss, idx):
    z_e = z_e.astype(jnp.float32)
    emb = embeddings.astype(jnp.float32)
    _, _, idx_ref, half_dist = _matched_reference(z_e, emb, commitment_cost)
    B = z_e.shape[0]
    # The chosen code must attain the minimum distance (ties allowed).
    d_sel = half_dist[jnp.arange(B), idx[:, 0]]
    d_opt = jnp.min(half_dist, axis=-1)
    assert jnp.allclose(d_sel, d_opt, atol=1e-4, rtol=1e-5), f"{name}: argmin not optimal"
    # z_q must be the (exact) codebook row of the chosen index.
    assert jnp.allclose(z_q, emb[idx[:, 0]], atol=1e-5), f"{name}: z_q gather mismatch"
    # Loss must equal the (1 + c) * mse forward value.
    mse = jnp.mean((emb[idx[:, 0]] - z_e) ** 2)
    assert jnp.allclose(loss, (1.0 + commitment_cost) * mse,
                        rtol=1e-5, atol=1e-7), f"{name}: loss mismatch"
    return idx_ref


if __name__ == "__main__":
    key = jax.random.PRNGKey(0)
    k1, k2, k3, k4 = jax.random.split(key, 4)
    cc = 0.1

    # --- Test 1: module-sized problem (matches the PyTorch spec defaults). ---
    num_embeddings, embedding_dim, batch = 64, 32, 8
    z_e = jax.random.normal(k1, (batch, embedding_dim), dtype=jnp.float32)
    embeddings = jax.random.uniform(                     # nn.Embedding init: U(-1/K, 1/K)
        k2, (num_embeddings, embedding_dim), dtype=jnp.float32,
        minval=-1.0 / num_embeddings, maxval=1.0 / num_embeddings)
    z_q, loss, idx = vector_quantize(z_e, embeddings, cc)
    jax.block_until_ready((z_q, loss, idx))
    idx_ref = _check("small", z_e, embeddings, cc, z_q, loss, idx)
    assert jnp.array_equal(idx[:, 0], idx_ref[:, 0]), "small: indices mismatch"

    # --- Test 2: exercises K-chunking, a multi-tile grid and a ragged last
    #             row-block (B not a multiple of tile_rows). -----------------
    K2, D2, B2 = 512, 32, 300
    z_e2 = jax.random.normal(k3, (B2, D2), dtype=jnp.float32)
    emb2 = 0.3 * jax.random.normal(k4, (K2, D2), dtype=jnp.float32)
    z_q2, loss2, idx2 = vector_quantize(z_e2, emb2, cc, tile_rows=256, k_chunk=128)
    jax.block_until_ready((z_q2, loss2, idx2))
    _check("large", z_e2, emb2, cc, z_q2, loss2, idx2)

    print("KERNEL_OK")
</pallas_src>

<mosaic_0001>
module attributes {stable_mosaic.version = 11 : i64} {
  func.func @_vq_kernel(%arg0: i32, %arg1: memref<8x33xbf16, #tpu.memory_space<vmem>>, %arg2: memref<64x33xbf16, #tpu.memory_space<vmem>>, %arg3: memref<64x32xf32, #tpu.memory_space<vmem>>, %arg4: memref<8x32xf32, #tpu.memory_space<vmem>>, %arg5: memref<1x1x8xi32, #tpu.memory_space<vmem>>) attributes {dimension_semantics = [#tpu.dimension_semantics<parallel>], iteration_bounds = array<i64: 1>, scalar_prefetch = 0 : i64, scratch_operands = 0 : i64, tpu.core_type = #tpu.core_type<tc>, window_params = [{transform_indices = @transform_0, window_bounds = array<i64: 8, 33>}, {pipeline_mode = #tpu.pipeline_mode<synchronous>, transform_indices = @transform_1, window_bounds = array<i64: 64, 33>}, {pipeline_mode = #tpu.pipeline_mode<synchronous>, transform_indices = @transform_2, window_bounds = array<i64: 64, 32>}, {transform_indices = @transform_3, window_bounds = array<i64: 8, 32>}, {transform_indices = @transform_4, window_bounds = array<i64: 1, 1, 8>}]} {
    %c0 = arith.constant 0 : index
    %c0_0 = arith.constant 0 : index
    %0 = vector.load %arg1[%c0, %c0_0] : memref<8x33xbf16, #tpu.memory_space<vmem>>, vector<8x33xbf16>
    %cst = arith.constant 0x7F800000 : f32
    %1 = vector.broadcast %cst : f32 to vector<1x8xf32>
    %c0_i32 = arith.constant 0 : i32
    %2 = vector.broadcast %c0_i32 : i32 to vector<1x8xi32>
    %c0_1 = arith.constant 0 : index
    %c0_2 = arith.constant 0 : index
    %3 = vector.load %arg2[%c0_1, %c0_2] : memref<64x33xbf16, #tpu.memory_space<vmem>>, vector<64x33xbf16>
    %cst_3 = arith.constant dense<0.000000e+00> : vector<64x8xf32>
    %4 = tpu.matmul %3, %0, %cst_3 {dimension_numbers = #tpu.dot_dimension_numbers<[1], [1], [0], [0], [0, 0, 1, 0], [], []>} : vector<64x33xbf16>, vector<8x33xbf16>, vector<64x8xf32> -> vector<64x8xf32>
    %cst_4 = arith.constant dense<0x7F800000> : vector<8xf32>
    %5 = vector.multi_reduction <minimumf>, %4, %cst_4 [0] : vector<64x8xf32> to vector<8xf32>
    %6 = vector.shape_cast %5 : vector<8xf32> to vector<1x8xf32>
    %7 = tpu.iota {dimensions = array<i32: 0>} : vector<64x8xi32>
    %c0_i32_5 = arith.constant 0 : i32
    %8 = vector.broadcast %c0_i32_5 : i32 to vector<64x8xi32>
    %9 = arith.addi %7, %8 : vector<64x8xi32>
    %10 = vector.broadcast %6 : vector<1x8xf32> to vector<64x8xf32>
    %11 = arith.cmpf oeq, %4, %10 : vector<64x8xf32>
    %c64_i32 = arith.constant 64 : i32
    %12 = vector.broadcast %c64_i32 : i32 to vector<64x8xi32>
    %13 = arith.select %11, %9, %12 : vector<64x8xi1>, vector<64x8xi32>
    %cst_6 = arith.constant dense<2147483647> : vector<8xi32>
    %14 = vector.multi_reduction <minsi>, %13, %cst_6 [0] : vector<64x8xi32> to vector<8xi32>
    %15 = vector.shape_cast %14 : vector<8xi32> to vector<1x8xi32>
    %16 = arith.cmpf olt, %6, %1 : vector<1x8xf32>
    %17 = arith.select %16, %15, %2 : vector<1x8xi1>, vector<1x8xi32>
    %cst_7 = arith.constant 0.000000e+00 : f32
    %18 = vector.broadcast %cst_7 : f32 to vector<8x32xf32>
    %19 = tpu.iota {dimensions = array<i32: 0>} : vector<64x8xi32>
    %c0_i32_8 = arith.constant 0 : i32
    %20 = vector.broadcast %c0_i32_8 : i32 to vector<64x8xi32>
    %21 = arith.addi %19, %20 : vector<64x8xi32>
    %22 = vector.broadcast %17 : vector<1x8xi32> to vector<64x8xi32>
    %23 = arith.cmpi eq, %21, %22 : vector<64x8xi32>
    %cst_9 = arith.constant 1.000000e+00 : f32
    %cst_10 = arith.constant 0.000000e+00 : f32
    %24 = vector.broadcast %cst_9 : f32 to vector<64x8xf32>
    %25 = vector.broadcast %cst_10 : f32 to vector<64x8xf32>
    %26 = arith.select %23, %24, %25 : vector<64x8xi1>, vector<64x8xf32>
    %c0_11 = arith.constant 0 : index
    %c0_12 = arith.constant 0 : index
    %27 = vector.load %arg3[%c0_11, %c0_12] : memref<64x32xf32, #tpu.memory_space<vmem>>, vector<64x32xf32>
    %cst_13 = arith.constant dense<0.000000e+00> : vector<8x32xf32>
    %28 = tpu.matmul %26, %27, %cst_13 {dimension_numbers = #tpu.dot_dimension_numbers<[0], [0], [1], [1], [0, 1, 1, 1], [], []>} : vector<64x8xf32>, vector<64x32xf32>, vector<8x32xf32> -> vector<8x32xf32>
    %29 = arith.addf %18, %28 : vector<8x32xf32>
    %c0_14 = arith.constant 0 : index
    %c0_15 = arith.constant 0 : index
    %30 = vector.load %arg4[%c0_14, %c0_15] : memref<8x32xf32, #tpu.memory_space<vmem>>, vector<8x32xf32>
    tpu.vector_store %arg4[%c0_14, %c0_15], %29 {strides = array<i32>} : memref<8x32xf32, #tpu.memory_space<vmem>>, vector<8x32xf32>,
    %31 = vector.shape_cast %17 : vector<1x8xi32> to vector<1x1x8xi32>
    %c0_16 = arith.constant 0 : index
    %c0_17 = arith.constant 0 : index
    %c0_18 = arith.constant 0 : index
    %32 = vector.load %arg5[%c0_16, %c0_17, %c0_18] : memref<1x1x8xi32, #tpu.memory_space<vmem>>, vector<1x1x8xi32>
    tpu.vector_store %arg5[%c0_16, %c0_17, %c0_18], %31 {strides = array<i32>} : memref<1x1x8xi32, #tpu.memory_space<vmem>>, vector<1x1x8xi32>,
    return
  }
  func.func @transform_0(%arg0: i32) -> (i32, i32) {
    %c0_i32 = arith.constant 0 : i32
    %c0_i32_0 = arith.constant 0 : i32
    return %arg0, %c0_i32 : i32, i32
  }
  func.func @transform_1(%arg0: i32) -> (i32, i32) {
    %c0_i32 = arith.constant 0 : i32
    %c0_i32_0 = arith.constant 0 : i32
    %c0_i32_1 = arith.constant 0 : i32
    return %c0_i32, %c0_i32_0 : i32, i32
  }
  func.func @transform_2(%arg0: i32) -> (i32, i32) {
    %c0_i32 = arith.constant 0 : i32
    %c0_i32_0 = arith.constant 0 : i32
    %c0_i32_1 = arith.constant 0 : i32
    return %c0_i32, %c0_i32_0 : i32, i32
  }
  func.func @transform_3(%arg0: i32) -> (i32, i32) {
    %c0_i32 = arith.constant 0 : i32
    %c0_i32_0 = arith.constant 0 : i32
    return %arg0, %c0_i32 : i32, i32
  }
  func.func @transform_4(%arg0: i32) -> (i32, i32, i32) {
    %c0_i32 = arith.constant 0 : i32
    %c0_i32_0 = arith.constant 0 : i32
    %c0_i32_1 = arith.constant 0 : i32
    return %arg0, %c0_i32, %c0_i32_0 : i32, i32, i32
  }
}

module attributes {stable_mosaic.version = 11 : i64} {
  func.func @_vq_kernel(%arg0: i32, %arg1: memref<8x33xbf16, #tpu.memory_space<vmem>>, %arg2: memref<64x33xbf16, #tpu.memory_space<vmem>>, %arg3: memref<64x32xf32, #tpu.memory_space<vmem>>, %arg4: memref<8x32xf32, #tpu.memory_space<vmem>>, %arg5: memref<1x1x8xi32, #tpu.memory_space<vmem>>) attributes {dimension_semantics = [#tpu.dimension_semantics<parallel>], iteration_bounds = array<i64: 1>, scalar_prefetch = 0 : i64, scratch_operands = 0 : i64, tpu.core_type = #tpu.core_type<tc>, window_params = [{transform_indices = @transform_0, window_bounds = array<i64: 8, 33>}, {pipeline_mode = #tpu.pipeline_mode<synchronous>, transform_indices = @transform_1, window_bounds = array<i64: 64, 33>}, {pipeline_mode = #tpu.pipeline_mode<synchronous>, transform_indices = @transform_2, window_bounds = array<i64: 64, 32>}, {transform_indices = @transform_3, window_bounds = array<i64: 8, 32>}, {transform_indices = @transform_4, window_bounds = array<i64: 1, 1, 8>}]} {
    %c0 = arith.constant 0 : index
    %c0_0 = arith.constant 0 : index
    %0 = vector.load %arg1[%c0, %c0_0] : memref<8x33xbf16, #tpu.memory_space<vmem>>, vector<8x33xbf16>
    %cst = arith.constant 0x7F800000 : f32
    %1 = vector.broadcast %cst : f32 to vector<1x8xf32>
    %c0_i32 = arith.constant 0 : i32
    %2 = vector.broadcast %c0_i32 : i32 to vector<1x8xi32>
    %c0_1 = arith.constant 0 : index
    %c0_2 = arith.constant 0 : index
    %3 = vector.load %arg2[%c0_1, %c0_2] : memref<64x33xbf16, #tpu.memory_space<vmem>>, vector<64x33xbf16>
    %cst_3 = arith.constant dense<0.000000e+00> : vector<64x8xf32>
    %4 = tpu.matmul %3, %0, %cst_3 {dimension_numbers = #tpu.dot_dimension_numbers<[1], [1], [0], [0], [0, 0, 1, 0], [], []>} : vector<64x33xbf16>, vector<8x33xbf16>, vector<64x8xf32> -> vector<64x8xf32>
    %cst_4 = arith.constant dense<0x7F800000> : vector<8xf32>
    %5 = vector.multi_reduction <minimumf>, %4, %cst_4 [0] : vector<64x8xf32> to vector<8xf32>
    %6 = vector.shape_cast %5 : vector<8xf32> to vector<1x8xf32>
    %7 = tpu.iota {dimensions = array<i32: 0>} : vector<64x8xi32>
    %c0_i32_5 = arith.constant 0 : i32
    %8 = vector.broadcast %c0_i32_5 : i32 to vector<64x8xi32>
    %9 = arith.addi %7, %8 : vector<64x8xi32>
    %10 = vector.broadcast %6 : vector<1x8xf32> to vector<64x8xf32>
    %11 = arith.cmpf oeq, %4, %10 : vector<64x8xf32>
    %c64_i32 = arith.constant 64 : i32
    %12 = vector.broadcast %c64_i32 : i32 to vector<64x8xi32>
    %13 = arith.select %11, %9, %12 : vector<64x8xi1>, vector<64x8xi32>
    %cst_6 = arith.constant dense<2147483647> : vector<8xi32>
    %14 = vector.multi_reduction <minsi>, %13, %cst_6 [0] : vector<64x8xi32> to vector<8xi32>
    %15 = vector.shape_cast %14 : vector<8xi32> to vector<1x8xi32>
    %16 = arith.cmpf olt, %6, %1 : vector<1x8xf32>
    %17 = arith.select %16, %15, %2 : vector<1x8xi1>, vector<1x8xi32>
    %cst_7 = arith.constant 0.000000e+00 : f32
    %18 = vector.broadcast %cst_7 : f32 to vector<8x32xf32>
    %19 = tpu.iota {dimensions = array<i32: 0>} : vector<64x8xi32>
    %c0_i32_8 = arith.constant 0 : i32
    %20 = vector.broadcast %c0_i32_8 : i32 to vector<64x8xi32>
    %21 = arith.addi %19, %20 : vector<64x8xi32>
    %22 = vector.broadcast %17 : vector<1x8xi32> to vector<64x8xi32>
    %23 = arith.cmpi eq, %21, %22 : vector<64x8xi32>
    %cst_9 = arith.constant 1.000000e+00 : f32
    %cst_10 = arith.constant 0.000000e+00 : f32
    %24 = vector.broadcast %cst_9 : f32 to vector<64x8xf32>
    %25 = vector.broadcast %cst_10 : f32 to vector<64x8xf32>
    %26 = arith.select %23, %24, %25 : vector<64x8xi1>, vector<64x8xf32>
    %c0_11 = arith.constant 0 : index
    %c0_12 = arith.constant 0 : index
    %27 = vector.load %arg3[%c0_11, %c0_12] : memref<64x32xf32, #tpu.memory_space<vmem>>, vector<64x32xf32>
    %cst_13 = arith.constant dense<0.000000e+00> : vector<8x32xf32>
    %28 = tpu.matmul %26, %27, %cst_13 {dimension_numbers = #tpu.dot_dimension_numbers<[0], [0], [1], [1], [0, 1, 1, 1], [], []>} : vector<64x8xf32>, vector<64x32xf32>, vector<8x32xf32> -> vector<8x32xf32>
    %29 = arith.addf %18, %28 : vector<8x32xf32>
    %c0_14 = arith.constant 0 : index
    %c0_15 = arith.constant 0 : index
    %30 = vector.load %arg4[%c0_14, %c0_15] : memref<8x32xf32, #tpu.memory_space<vmem>>, vector<8x32xf32>
    tpu.vector_store %arg4[%c0_14, %c0_15], %29 {strides = array<i32>} : memref<8x32xf32, #tpu.memory_space<vmem>>, vector<8x32xf32>,
    %31 = vector.shape_cast %17 : vector<1x8xi32> to vector<1x1x8xi32>
    %c0_16 = arith.constant 0 : index
    %c0_17 = arith.constant 0 : index
    %c0_18 = arith.constant 0 : index
    %32 = vector.load %arg5[%c0_16, %c0_17, %c0_18] : memref<1x1x8xi32, #tpu.memory_space<vmem>>, vector<1x1x8xi32>
    tpu.vector_store %arg5[%c0_16, %c0_17, %c0_18], %31 {strides = array<i32>} : memref<1x1x8xi32, #tpu.memory_space<vmem>>, vector<1x1x8xi32>,
    return
  }
  func.func @transform_0(%arg0: i32) -> (i32, i32) {
    %c0_i32 = arith.constant 0 : i32
    %c0_i32_0 = arith.constant 0 : i32
    return %arg0, %c0_i32 : i32, i32
  }
  func.func @transform_1(%arg0: i32) -> (i32, i32) {
    %c0_i32 = arith.constant 0 : i32
    %c0_i32_0 = arith.constant 0 : i32
    %c0_i32_1 = arith.constant 0 : i32
    return %c0_i32, %c0_i32_0 : i32, i32
  }
  func.func @transform_2(%arg0: i32) -> (i32, i32) {
    %c0_i32 = arith.constant 0 : i32
    %c0_i32_0 = arith.constant 0 : i32
    %c0_i32_1 = arith.constant 0 : i32
    return %c0_i32, %c0_i32_0 : i32, i32
  }
  func.func @transform_3(%arg0: i32) -> (i32, i32) {
    %c0_i32 = arith.constant 0 : i32
    %c0_i32_0 = arith.constant 0 : i32
    return %arg0, %c0_i32 : i32, i32
  }
  func.func @transform_4(%arg0: i32) -> (i32, i32, i32) {
    %c0_i32 = arith.constant 0 : i32
    %c0_i32_0 = arith.constant 0 : i32
    %c0_i32_1 = arith.constant 0 : i32
    return %arg0, %c0_i32, %c0_i32_0 : i32, i32, i32
  }
}

</mosaic_0001>

<llo_original>
// kernel: tpu_custom_call.1
$region0: #{tpu_custom_call.1}
  #allocation0 [shape = 'u32[]', space=smem, size = 0x4, offset = 0x4, fixed_abs, tag = 'smem constant byte address 0x4 - core index']
  #allocation1 [shape = 'u32[144,128]{1,0:T(1,128)}', space=vmem, size = 0x12000, scoped, tag = 'internal scratch']
  %s0 = inlined_call_operand.vmem [shape: bf16[8,33], index: 0, kind: input, shape index: {}]
  %s1 = inlined_call_operand.vmem [shape: bf16[64,33], index: 1, kind: input, shape index: {}]
  %s2 = inlined_call_operand.vmem [shape: f32[64,32], index: 2, kind: input, shape index: {}]
  %s3 = inlined_call_operand.hbm [shape: f32[8,32], index: 3, kind: output, shape index: {0}]
  %s4 = inlined_call_operand.hbm [shape: s32[1,1,8], index: 4, kind: output, shape index: {1}]
  %5 = xla_tuple %s3, %s4
  %s6 = sld [smem:[#allocation0]]
  $region30: #{tpu_custom_call.1} parent=0
    _
  %s8 = ssub.s32 1, %s6
  %s9 = scalar_select 0, %s8, %s6
  $region1: #{tpu_custom_call.1} parent=0
    #allocation2 [shape = 'u8[4096]{0}', space=vmem, size = 0x1000, scoped, tag = 'output window, operand 0, single buffered']
    #allocation3 [shape = 's32[1]{0}', space=sflag, size = 0x4, scoped, tag = 'scoped memory for tpu_custom_call.1']
    #allocation4 [shape = 'u8[512]{0}', space=vmem, size = 0x400, scoped, tag = 'output window, operand 1, single buffered']
    #allocation5 [shape = 's32[1]{0}', space=sflag, size = 0x4, scoped, tag = 'scoped memory for tpu_custom_call.1']
    %10 = vsyncpa [#allocation3], 0
    %11 = vsyncpa [#allocation5], 0
    // Predicated region
    $region2: #{tpu_custom_call.1} parent=1 // pred_check
      _
    $region3: #{tpu_custom_call.1} parent=1 // pred_check_branch
      %13 = sbr.rel (0) target = $region5
    $region4: #{tpu_custom_call.1} parent=1 // pred_region
      _
    $region5: #{tpu_custom_call.1} parent=1 // pred_fallthru
      _
    // Predicated region
    $region6: #{tpu_custom_call.1} parent=1 // pred_check
      _
    $region7: #{tpu_custom_call.1} parent=1 // pred_check_branch
      %15 = sbr.rel (0) target = $region9
    $region8: #{tpu_custom_call.1} parent=1 // pred_region
      _
    $region9: #{tpu_custom_call.1} parent=1 // pred_fallthru
      _
    // Predicated region
    $region10: #{tpu_custom_call.1} parent=1 // pred_check
      _
    $region11: #{tpu_custom_call.1} parent=1 // pred_check_branch
      %17 = sbr.rel (0) target = $region13
    $region12: #{tpu_custom_call.1} parent=1 // pred_region
      _
    $region13: #{tpu_custom_call.1} parent=1 // pred_fallthru
      _
    %v19 = vld [vmem:[%s0] sm:$0xf]
    %v20 = vld [vmem:[%s1] sm:$0xf]
    %v21 = vld [vmem:[%s1 + $0x4] sm:$0xf]
    %v22 = vld [vmem:[%s1 + $0x8] sm:$0xf]
    %v23 = vld [vmem:[%s1 + $0xc] sm:$0xf]
    %v24 = vld [vmem:[%s1 + $0x10] sm:$0xf]
    %v25 = vld [vmem:[%s1 + $0x14] sm:$0xf]
    %v26 = vld [vmem:[%s1 + $0x18] sm:$0xf]
    %v27 = vld [vmem:[%s1 + $0x1c] sm:$0xf]
    %v36 = vunpack.c.l.b16 %v20
    %v37 = vunpack.c.l.b16 %v21
    %v38 = vunpack.c.l.b16 %v22
    %v39 = vunpack.c.l.b16 %v23
    %v40 = vunpack.c.l.b16 %v24
    %v41 = vunpack.c.l.b16 %v25
    %v42 = vunpack.c.l.b16 %v26
    %v43 = vunpack.c.l.b16 %v27
    %v44 = vpack.c.b16 %v37, %v36
    %v45 = vpack.c.b16 %v39, %v38
    %v46 = vpack.c.b16 %v41, %v40
    %v47 = vpack.c.b16 %v43, %v42
    %vm48 = vcmask 269312
    %v50 = vsel %vm48, %v44, 0
    %v53 = vsel %vm48, %v45, 0
    %v56 = vsel %vm48, %v46, 0
    %v59 = vsel %vm48, %v47, 0
    %v62 = vsel %vm48, %v19, 0
    %64 = vmatprep.subr.bf16.mxu0 0
    %65 = vmatpush1.bf16.xpose.msra.mxu0 %v62
    %66 = vmatprep.subr.bf16.mxu0 0
    %67 = vmatpush1.bf16.xpose.msra.mxu0 0
    %68 = vmatprep.subr.bf16.mxu0 0
    %69 = vmatpush1.bf16.xpose.msra.mxu0 0
    %70 = vmatprep.subr.bf16.mxu0 0
    %71 = vmatpush1.bf16.xpose.msra.mxu0 0
    %72 = vmatprep.subr.bf16.mxu0 0
    %73 = vmatpush1.bf16.xpose.msra.mxu0 0
    %74 = vmatprep.subr.bf16.mxu0 0
    %75 = vmatpush1.bf16.xpose.msra.mxu0 0
    %76 = vmatprep.subr.bf16.mxu0 0
    %77 = vmatpush1.bf16.xpose.msra.mxu0 0
    %78 = vmatprep.subr.bf16.mxu0 0
    %79 = vmatpush1.bf16.xpose.msra.mxu0 0
    %80 = vmatprep.subr.bf16.mxu0 0
    %81 = vmatpush1.bf16.xpose.msra.mxu0 0
    %82 = vmatprep.subr.bf16.mxu0 0
    %83 = vmatpush1.bf16.xpose.msra.mxu0 0
    %84 = vmatprep.subr.bf16.mxu0 0
    %85 = vmatpush1.bf16.xpose.msra.mxu0 0
    %86 = vmatprep.subr.bf16.mxu0 0
    %87 = vmatpush1.bf16.xpose.msra.mxu0 0
    %88 = vmatprep.subr.bf16.mxu0 0
    %89 = vmatpush1.bf16.xpose.msra.mxu0 0
    %90 = vmatprep.subr.bf16.mxu0 0
    %91 = vmatpush1.bf16.xpose.msra.mxu0 0
    %92 = vmatprep.subr.bf16.mxu0 0
    %93 = vmatpush1.bf16.xpose.msra.mxu0 0
    %94 = vmatprep.subr.bf16.mxu0 0
    %95 = vmatpush1.bf16.xpose.msra.mxu0 0
    %96 = vmatprep.mubr.bf16.mxu0 0
    %97 = vmatmul.mubr.bf16.gmra.mrb[0].mxu0 %v50
    %v98 = vpop.f32.mrb[0].mxu0
    %v99 = vadd.f32 0.0, %v98
    %v100 = vpop.f32.mrb[0].mxu0
    %v101 = vpop.f32.mrb[0].mxu0
    %v102 = vadd.f32 0.0, %v101
    %v103 = vpop.f32.mrb[0].mxu0
    %104 = vmatprep.mubr.bf16.mxu0 0
    %105 = vmatmul.mubr.bf16.gmra.mrb[0].mxu0 %v53
    %v106 = vpop.f32.mrb[0].mxu0
    %v107 = vadd.f32 0.0, %v106
    %v108 = vpop.f32.mrb[0].mxu0
    %v109 = vpop.f32.mrb[0].mxu0
    %v110 = vadd.f32 0.0, %v109
    %v111 = vpop.f32.mrb[0].mxu0
    %112 = vmatprep.mubr.bf16.mxu0 0
    %113 = vmatmul.mubr.bf16.gmra.mrb[0].mxu0 %v56
    %v114 = vpop.f32.mrb[0].mxu0
    %v115 = vadd.f32 0.0, %v114
    %v116 = vpop.f32.mrb[0].mxu0
    %v117 = vpop.f32.mrb[0].mxu0
    %v118 = vadd.f32 0.0, %v117
    %v119 = vpop.f32.mrb[0].mxu0
    %120 = vmatprep.mubr.bf16.mxu0 0
    %121 = vmatmul.mubr.bf16.gmra.mrb[0].mxu0 %v59
    %v122 = vpop.f32.mrb[0].mxu0
    %v123 = vadd.f32 0.0, %v122
    %v124 = vpop.f32.mrb[0].mxu0
    %v125 = vpop.f32.mrb[0].mxu0
    %v126 = vadd.f32 0.0, %v125
    %v127 = vpop.f32.mrb[0].mxu0
    %128 = vdwg.mxu0
    %vm129 = vcmask 64512
    %v130 = vsel %vm129, %v99, inf
    %v131 = vsel %vm129, %v102, inf
    %v132 = vsel %vm129, %v107, inf
    %v133 = vsel %vm129, %v110, inf
    %v134 = vsel %vm129, %v115, inf
    %v135 = vmin.f32 %v130, %v134
    %v136 = vsel %vm129, %v118, inf
    %v137 = vmin.f32 %v131, %v136
    %v138 = vsel %vm129, %v123, inf
    %v139 = vmin.f32 %v132, %v138
    %v140 = vsel %vm129, %v126, inf
    %v141 = vmin.f32 %v133, %v140
    %v142 = vmin.f32 %v135, %v137
    %v143 = vmin.f32 %v139, %v141
    %v144 = vmin.f32 %v142, %v143
    %v145 = vrot.slane %v144, 4
    %v146 = vmin.f32 %v144, %v145
    %v147 = vrot.slane %v146, 2
    %v148 = vmin.f32 %v146, %v147
    %v149 = vrot.slane %v148, 1
    %v150 = vmin.f32 %v148, %v149
    %v151 = vlaneseq
    %v152 = vshrl.u32 %v151, 7
    %v153 = vadd.s32 %v152, 8
    %v154 = vadd.s32 %v152, 16
    %v155 = vadd.s32 %v152, 24
    %v156 = vadd.s32 %v152, 32
    %v157 = vadd.s32 %v152, 40
    %v158 = vadd.s32 %v152, 48
    %v159 = vadd.s32 %v152, 56
    %vm160 = vcmp.eq.f32.partialorder %v99, %v150
    %vm161 = vcmp.eq.f32.partialorder %v102, %v150
    %vm162 = vcmp.eq.f32.partialorder %v107, %v150
    %vm163 = vcmp.eq.f32.partialorder %v110, %v150
    %vm164 = vcmp.eq.f32.partialorder %v115, %v150
    %vm165 = vcmp.eq.f32.partialorder %v118, %v150
    %vm166 = vcmp.eq.f32.partialorder %v123, %v150
    %vm167 = vcmp.eq.f32.partialorder %v126, %v150
    %v168 = vsel %vm160, %v152, 64
    %v169 = vsel %vm161, %v153, 64
    %v170 = vsel %vm162, %v154, 64
    %v171 = vsel %vm163, %v155, 64
    %v172 = vsel %vm164, %v156, 64
    %v173 = vsel %vm165, %v157, 64
    %v174 = vsel %vm166, %v158, 64
    %v175 = vsel %vm167, %v159, 64
    %v176 = vsel %vm129, %v168, 2147483647
    %v177 = vsel %vm129, %v169, 2147483647
    %v178 = vsel %vm129, %v170, 2147483647
    %v179 = vsel %vm129, %v171, 2147483647
    %v180 = vsel %vm129, %v172, 2147483647
    %vm181 = vcmp.lt.s32.totalorder %v176, %v180
    %v182 = vsel %vm181, %v176, %v180
    %v183 = vsel %vm129, %v173, 2147483647
    %vm184 = vcmp.lt.s32.totalorder %v177, %v183
    %v185 = vsel %vm184, %v177, %v183
    %v186 = vsel %vm129, %v174, 2147483647
    %vm187 = vcmp.lt.s32.totalorder %v178, %v186
    %v188 = vsel %vm187, %v178, %v186
    %v189 = vsel %vm129, %v175, 2147483647
    %vm190 = vcmp.lt.s32.totalorder %v179, %v189
    %v191 = vsel %vm190, %v179, %v189
    %vm192 = vcmp.lt.s32.totalorder %v182, %v185
    %v193 = vsel %vm192, %v182, %v185
    %vm194 = vcmp.lt.s32.totalorder %v188, %v191
    %v195 = vsel %vm194, %v188, %v191
    %vm196 = vcmp.lt.s32.totalorder %v193, %v195
    %v197 = vsel %vm196, %v193, %v195
    %v198 = vrot.slane %v197, 4
    %vm199 = vcmp.lt.s32.totalorder %v197, %v198
    %v200 = vsel %vm199, %v197, %v198
    %v201 = vrot.slane %v200, 2
    %vm202 = vcmp.lt.s32.totalorder %v200, %v201
    %v203 = vsel %vm202, %v200, %v201
    %v204 = vrot.slane %v203, 1
    %vm205 = vcmp.lt.s32.totalorder %v203, %v204
    %v206 = vsel %vm205, %v203, %v204
    %vm207 = vcmp.lt.f32.partialorder %v150, inf
    %v208 = vsel %vm207, %v206, 0
    %vm209 = vcmp.eq.s32.totalorder %v152, %v208
    %vm210 = vcmp.eq.s32.totalorder %v153, %v208
    %vm211 = vcmp.eq.s32.totalorder %v154, %v208
    %vm212 = vcmp.eq.s32.totalorder %v155, %v208
    %vm213 = vcmp.eq.s32.totalorder %v156, %v208
    %vm214 = vcmp.eq.s32.totalorder %v157, %v208
    %vm215 = vcmp.eq.s32.totalorder %v158, %v208
    %vm216 = vcmp.eq.s32.totalorder %v159, %v208
    %v217 = vsel %vm209, 1.0, 0.0
    %v218 = vsel %vm210, 1.0, 0.0
    %v219 = vsel %vm211, 1.0, 0.0
    %v220 = vsel %vm212, 1.0, 0.0
    %v221 = vsel %vm213, 1.0, 0.0
    %v222 = vsel %vm214, 1.0, 0.0
    %v223 = vsel %vm215, 1.0, 0.0
    %v224 = vsel %vm216, 1.0, 0.0
    %v225 = vld [vmem:[%s2] sm:$0xff]
    %v226 = vld [vmem:[%s2 + $0x8] sm:$0xff]
    %v227 = vld [vmem:[%s2 + $0x10] sm:$0xff]
    %v228 = vld [vmem:[%s2 + $0x18] sm:$0xff]
    %v229 = vld [vmem:[%s2 + $0x20] sm:$0xff]
    %v230 = vld [vmem:[%s2 + $0x28] sm:$0xff]
    %v231 = vld [vmem:[%s2 + $0x30] sm:$0xff]
    %v232 = vld [vmem:[%s2 + $0x38] sm:$0xff]
    %233 = vxpose.xlu0.b32.start [1/16] %v217, 128
    %234 = vxpose.xlu0.b32.cont [2/16] %v218, 128
    %235 = vxpose.xlu0.b32.cont [3/16] %v219, 128
    %236 = vxpose.xlu0.b32.cont [4/16] %v220, 128
    %237 = vxpose.xlu0.b32.cont [5/16] %v221, 128
    %238 = vxpose.xlu0.b32.cont [6/16] %v222, 128
    %239 = vxpose.xlu0.b32.cont [7/16] %v223, 128
    %240 = vxpose.xlu0.b32.cont [8/16] %v224, 128
    %241 = vxpose.xlu0.b32.cont [9/16] 0.0, 128
    %242 = vxpose.xlu0.b32.cont [10/16] 0.0, 128
    %243 = vxpose.xlu0.b32.cont [11/16] 0.0, 128
    %244 = vxpose.xlu0.b32.cont [12/16] 0.0, 128
    %245 = vxpose.xlu0.b32.cont [13/16] 0.0, 128
    %246 = vxpose.xlu0.b32.cont [14/16] 0.0, 128
    %247 = vxpose.xlu0.b32.cont [15/16] 0.0, 128
    %248 = vxpose.xlu0.b32.end [16/16] 0.0, 128
    %v249 = vpop.trf.xlu0
    %v250 = vpop.trf.xlu0
    %v251 = vpop.trf.xlu0
    %v252 = vpop.trf.xlu0
    %v253 = vpop.trf.xlu0
    %v254 = vpop.trf.xlu0
    %v255 = vpop.trf.xlu0
    %v256 = vpop.trf.xlu0
    %v257 = vpop.trf.xlu0
    %v258 = vpop.trf.xlu0
    %v259 = vpop.trf.xlu0
    %v260 = vpop.trf.xlu0
    %v261 = vpop.trf.xlu0
    %v262 = vpop.trf.xlu0
    %v263 = vpop.trf.xlu0
    %v264 = vpop.trf.xlu0
    %vm265 = vcmask 523264
    %v267 = vsel %vm265, %v249, 0
    %269 = vmatprep.subr.mxu0 0.0
    %270 = vmatpush1.msra.mxu0 %v225
    %271 = vmatprep.subr.mxu0 0.0
    %272 = vmatpush1.msra.mxu0 %v226
    %273 = vmatprep.subr.mxu0 0.0
    %274 = vmatpush1.msra.mxu0 %v227
    %275 = vmatprep.subr.mxu0 0.0
    %276 = vmatpush1.msra.mxu0 %v228
    %277 = vmatprep.subr.mxu0 0.0
    %278 = vmatpush1.msra.mxu0 %v229
    %279 = vmatprep.subr.mxu0 0.0
    %280 = vmatpush1.msra.mxu0 %v230
    %281 = vmatprep.subr.mxu0 0.0
    %282 = vmatpush1.msra.mxu0 %v231
    %283 = vmatprep.subr.mxu0 0.0
    %284 = vmatpush1.msra.mxu0 %v232
    %285 = vmatprep.subr.mxu0 0.0
    %286 = vmatpush1.msra.mxu0 0.0
    %287 = vmatprep.subr.mxu0 0.0
    %288 = vmatpush1.msra.mxu0 0.0
    %289 = vmatprep.subr.mxu0 0.0
    %290 = vmatpush1.msra.mxu0 0.0
    %291 = vmatprep.subr.mxu0 0.0
    %292 = vmatpush1.msra.mxu0 0.0
    %293 = vmatprep.subr.mxu0 0.0
    %294 = vmatpush1.msra.mxu0 0.0
    %295 = vmatprep.subr.mxu0 0.0
    %296 = vmatpush1.msra.mxu0 0.0
    %297 = vmatprep.subr.mxu0 0.0
    %298 = vmatpush1.msra.mxu0 0.0
    %299 = vmatprep.subr.mxu0 0.0
    %300 = vmatpush1.msra.mxu0 0.0
    %301 = vmatprep.subr.mxu0 0.0
    %302 = vmatpush1.msra.mxu0 0.0
    %303 = vmatprep.subr.mxu0 0.0
    %304 = vmatpush1.msra.mxu0 0.0
    %305 = vmatprep.subr.mxu0 0.0
    %306 = vmatpush1.msra.mxu0 0.0
    %307 = vmatprep.subr.mxu0 0.0
    %308 = vmatpush1.msra.mxu0 0.0
    %309 = vmatprep.subr.mxu0 0.0
    %310 = vmatpush1.msra.mxu0 0.0
    %311 = vmatprep.subr.mxu0 0.0
    %312 = vmatpush1.msra.mxu0 0.0
    %313 = vmatprep.subr.mxu0 0.0
    %314 = vmatpush1.msra.mxu0 0.0
    %315 = vmatprep.subr.mxu0 0.0
    %316 = vmatpush1.msra.mxu0 0.0
    %317 = vmatprep.subr.mxu0 0.0
    %318 = vmatpush1.msra.mxu0 0.0
    %319 = vmatprep.subr.mxu0 0.0
    %320 = vmatpush1.msra.mxu0 0.0
    %321 = vmatprep.subr.mxu0 0.0
    %322 = vmatpush1.msra.mxu0 0.0
    %323 = vmatprep.subr.mxu0 0.0
    %324 = vmatpush1.msra.mxu0 0.0
    %325 = vmatprep.subr.mxu0 0.0
    %326 = vmatpush1.msra.mxu0 0.0
    %327 = vmatprep.subr.mxu0 0.0
    %328 = vmatpush1.msra.mxu0 0.0
    %329 = vmatprep.subr.mxu0 0.0
    %330 = vmatpush1.msra.mxu0 0.0
    %331 = vmatprep.subr.mxu0 0.0
    %332 = vmatpush1.msra.mxu0 0.0
    %333 = vmatprep.mubr.f32.mxu0 0.0
    %334 = vmatmul.mubr.f32.gmra.mrb[0].mxu0 %v267
    %v335 = vpop.f32.mrb[0].mxu0
    %v336 = vadd.f32 0.0, %v335
    %v337 = vpop.f32.mrb[0].mxu0
    %338 = vdwg.mxu0
    %vm339 = vcmask 261120
    %340 = vst.msk [vmem:[#allocation2] sm:$0xff] %vm339, %v336
    %vm341 = vcmask 57344
    %342 = vst.msk [vmem:[#allocation4] sm:$0x1] %vm341, %v208
    // Predicated region
    $region14: #{tpu_custom_call.1} parent=1 // pred_check
      _
    $region15: #{tpu_custom_call.1} parent=1 // pred_check_branch
      %344 = sbr.rel (0) target = $region17
    $region16: #{tpu_custom_call.1} parent=1 // pred_region
      %s346 = ssub.s32 128, 128
      %347 = vsyncadd [#allocation3], %s346
      %s349 = sshll.u32 [#allocation2], 4
      %s350 = int_to_ptr.vmem [resolvable:$true] %s349
      %352 = dma.vmem_to_hbm [thread:$0]  %s350, 128, %s3, [#allocation3]
    $region17: #{tpu_custom_call.1} parent=1 // pred_fallthru
      _
    // Predicated region
    $region18: #{tpu_custom_call.1} parent=1 // pred_check
      _
    $region19: #{tpu_custom_call.1} parent=1 // pred_check_branch
      %354 = sbr.rel (0) target = $region21
    $region20: #{tpu_custom_call.1} parent=1 // pred_region
      %s356 = ssub.s32 16, 16
      %357 = vsyncadd [#allocation5], %s356
      %s359 = sshll.u32 [#allocation4], 4
      %s360 = int_to_ptr.vmem [resolvable:$true] %s359
      %362 = dma.vmem_to_hbm [thread:$0]  %s360, 16, %s4, [#allocation5]
    $region21: #{tpu_custom_call.1} parent=1 // pred_fallthru
      _
    // Predicated region
    $region22: #{tpu_custom_call.1} parent=1 // pred_check
      _
    $region23: #{tpu_custom_call.1} parent=1 // pred_check_branch
      %364 = sbr.rel (0) target = $region25
    $region24: #{tpu_custom_call.1} parent=1 // pred_region
      %365 = dma.done [#allocation3], 128
    $region25: #{tpu_custom_call.1} parent=1 // pred_fallthru
      _
    // Predicated region
    $region26: #{tpu_custom_call.1} parent=1 // pred_check
      _
    $region27: #{tpu_custom_call.1} parent=1 // pred_check_branch
      %367 = sbr.rel (0) target = $region29
    $region28: #{tpu_custom_call.1} parent=1 // pred_region
      %368 = dma.done [#allocation5], 16
    $region29: #{tpu_custom_call.1} parent=1 // pred_fallthru
      _
    %369 = vsyncpa [#allocation3], 1
    %370 = vsyncpa [#allocation5], 1

// kernel: tpu_custom_call.1
$region0: #{tpu_custom_call.1}
  #allocation0 [shape = 'u32[]', space=smem, size = 0x4, offset = 0x4, fixed_abs, tag = 'smem constant byte address 0x4 - core index']
  #allocation1 [shape = 'u32[144,128]{1,0:T(1,128)}', space=vmem, size = 0x12000, scoped, tag = 'internal scratch']
  %s0 = inlined_call_operand.vmem [shape: bf16[8,33], index: 0, kind: input, shape index: {}]
  %s1 = inlined_call_operand.vmem [shape: bf16[64,33], index: 1, kind: input, shape index: {}]
  %s2 = inlined_call_operand.vmem [shape: f32[64,32], index: 2, kind: input, shape index: {}]
  %s3 = inlined_call_operand.hbm [shape: f32[8,32], index: 3, kind: output, shape index: {0}]
  %s4 = inlined_call_operand.hbm [shape: s32[1,1,8], index: 4, kind: output, shape index: {1}]
  %5 = xla_tuple %s3, %s4
  %s6 = sld [smem:[#allocation0]]
  $region30: #{tpu_custom_call.1} parent=0
    _
  %s8 = ssub.s32 1, %s6
  %s9 = scalar_select 0, %s8, %s6
  $region1: #{tpu_custom_call.1} parent=0
    #allocation2 [shape = 'u8[4096]{0}', space=vmem, size = 0x1000, scoped, tag = 'output window, operand 0, single buffered']
    #allocation3 [shape = 's32[1]{0}', space=sflag, size = 0x4, scoped, tag = 'scoped memory for tpu_custom_call.1']
    #allocation4 [shape = 'u8[512]{0}', space=vmem, size = 0x400, scoped, tag = 'output window, operand 1, single buffered']
    #allocation5 [shape = 's32[1]{0}', space=sflag, size = 0x4, scoped, tag = 'scoped memory for tpu_custom_call.1']
    %10 = vsyncpa [#allocation3], 0
    %11 = vsyncpa [#allocation5], 0
    // Predicated region
    $region2: #{tpu_custom_call.1} parent=1 // pred_check
      _
    $region3: #{tpu_custom_call.1} parent=1 // pred_check_branch
      %13 = sbr.rel (0) target = $region5
    $region4: #{tpu_custom_call.1} parent=1 // pred_region
      _
    $region5: #{tpu_custom_call.1} parent=1 // pred_fallthru
      _
    // Predicated region
    $region6: #{tpu_custom_call.1} parent=1 // pred_check
      _
    $region7: #{tpu_custom_call.1} parent=1 // pred_check_branch
      %15 = sbr.rel (0) target = $region9
    $region8: #{tpu_custom_call.1} parent=1 // pred_region
      _
    $region9: #{tpu_custom_call.1} parent=1 // pred_fallthru
      _
    // Predicated region
    $region10: #{tpu_custom_call.1} parent=1 // pred_check
      _
    $region11: #{tpu_custom_call.1} parent=1 // pred_check_branch
      %17 = sbr.rel (0) target = $region13
    $region12: #{tpu_custom_call.1} parent=1 // pred_region
      _
    $region13: #{tpu_custom_call.1} parent=1 // pred_fallthru
      _
    %v19 = vld [vmem:[%s0] sm:$0xf]
    %v20 = vld [vmem:[%s1] sm:$0xf]
    %v21 = vld [vmem:[%s1 + $0x4] sm:$0xf]
    %v22 = vld [vmem:[%s1 + $0x8] sm:$0xf]
    %v23 = vld [vmem:[%s1 + $0xc] sm:$0xf]
    %v24 = vld [vmem:[%s1 + $0x10] sm:$0xf]
    %v25 = vld [vmem:[%s1 + $0x14] sm:$0xf]
    %v26 = vld [vmem:[%s1 + $0x18] sm:$0xf]
    %v27 = vld [vmem:[%s1 + $0x1c] sm:$0xf]
    %v36 = vunpack.c.l.b16 %v20
    %v37 = vunpack.c.l.b16 %v21
    %v38 = vunpack.c.l.b16 %v22
    %v39 = vunpack.c.l.b16 %v23
    %v40 = vunpack.c.l.b16 %v24
    %v41 = vunpack.c.l.b16 %v25
    %v42 = vunpack.c.l.b16 %v26
    %v43 = vunpack.c.l.b16 %v27
    %v44 = vpack.c.b16 %v37, %v36
    %v45 = vpack.c.b16 %v39, %v38
    %v46 = vpack.c.b16 %v41, %v40
    %v47 = vpack.c.b16 %v43, %v42
    %vm48 = vcmask 269312
    %v50 = vsel %vm48, %v44, 0
    %v53 = vsel %vm48, %v45, 0
    %v56 = vsel %vm48, %v46, 0
    %v59 = vsel %vm48, %v47, 0
    %v62 = vsel %vm48, %v19, 0
    %64 = vmatprep.subr.bf16.mxu0 0
    %65 = vmatpush1.bf16.xpose.msra.mxu0 %v62
    %66 = vmatprep.subr.bf16.mxu0 0
    %67 = vmatpush1.bf16.xpose.msra.mxu0 0
    %68 = vmatprep.subr.bf16.mxu0 0
    %69 = vmatpush1.bf16.xpose.msra.mxu0 0
    %70 = vmatprep.subr.bf16.mxu0 0
    %71 = vmatpush1.bf16.xpose.msra.mxu0 0
    %72 = vmatprep.subr.bf16.mxu0 0
    %73 = vmatpush1.bf16.xpose.msra.mxu0 0
    %74 = vmatprep.subr.bf16.mxu0 0
    %75 = vmatpush1.bf16.xpose.msra.mxu0 0
    %76 = vmatprep.subr.bf16.mxu0 0
    %77 = vmatpush1.bf16.xpose.msra.mxu0 0
    %78 = vmatprep.subr.bf16.mxu0 0
    %79 = vmatpush1.bf16.xpose.msra.mxu0 0
    %80 = vmatprep.subr.bf16.mxu0 0
    %81 = vmatpush1.bf16.xpose.msra.mxu0 0
    %82 = vmatprep.subr.bf16.mxu0 0
    %83 = vmatpush1.bf16.xpose.msra.mxu0 0
    %84 = vmatprep.subr.bf16.mxu0 0
    %85 = vmatpush1.bf16.xpose.msra.mxu0 0
    %86 = vmatprep.subr.bf16.mxu0 0
    %87 = vmatpush1.bf16.xpose.msra.mxu0 0
    %88 = vmatprep.subr.bf16.mxu0 0
    %89 = vmatpush1.bf16.xpose.msra.mxu0 0
    %90 = vmatprep.subr.bf16.mxu0 0
    %91 = vmatpush1.bf16.xpose.msra.mxu0 0
    %92 = vmatprep.subr.bf16.mxu0 0
    %93 = vmatpush1.bf16.xpose.msra.mxu0 0
    %94 = vmatprep.subr.bf16.mxu0 0
    %95 = vmatpush1.bf16.xpose.msra.mxu0 0
    %96 = vmatprep.mubr.bf16.mxu0 0
    %97 = vmatmul.mubr.bf16.gmra.mrb[0].mxu0 %v50
    %v98 = vpop.f32.mrb[0].mxu0
    %v99 = vadd.f32 0.0, %v98
    %v100 = vpop.f32.mrb[0].mxu0
    %v101 = vpop.f32.mrb[0].mxu0
    %v102 = vadd.f32 0.0, %v101
    %v103 = vpop.f32.mrb[0].mxu0
    %104 = vmatprep.mubr.bf16.mxu0 0
    %105 = vmatmul.mubr.bf16.gmra.mrb[0].mxu0 %v53
    %v106 = vpop.f32.mrb[0].mxu0
    %v107 = vadd.f32 0.0, %v106
    %v108 = vpop.f32.mrb[0].mxu0
    %v109 = vpop.f32.mrb[0].mxu0
    %v110 = vadd.f32 0.0, %v109
    %v111 = vpop.f32.mrb[0].mxu0
    %112 = vmatprep.mubr.bf16.mxu0 0
    %113 = vmatmul.mubr.bf16.gmra.mrb[0].mxu0 %v56
    %v114 = vpop.f32.mrb[0].mxu0
    %v115 = vadd.f32 0.0, %v114
    %v116 = vpop.f32.mrb[0].mxu0
    %v117 = vpop.f32.mrb[0].mxu0
    %v118 = vadd.f32 0.0, %v117
    %v119 = vpop.f32.mrb[0].mxu0
    %120 = vmatprep.mubr.bf16.mxu0 0
    %121 = vmatmul.mubr.bf16.gmra.mrb[0].mxu0 %v59
    %v122 = vpop.f32.mrb[0].mxu0
    %v123 = vadd.f32 0.0, %v122
    %v124 = vpop.f32.mrb[0].mxu0
    %v125 = vpop.f32.mrb[0].mxu0
    %v126 = vadd.f32 0.0, %v125
    %v127 = vpop.f32.mrb[0].mxu0
    %128 = vdwg.mxu0
    %vm129 = vcmask 64512
    %v130 = vsel %vm129, %v99, inf
    %v131 = vsel %vm129, %v102, inf
    %v132 = vsel %vm129, %v107, inf
    %v133 = vsel %vm129, %v110, inf
    %v134 = vsel %vm129, %v115, inf
    %v135 = vmin.f32 %v130, %v134
    %v136 = vsel %vm129, %v118, inf
    %v137 = vmin.f32 %v131, %v136
    %v138 = vsel %vm129, %v123, inf
    %v139 = vmin.f32 %v132, %v138
    %v140 = vsel %vm129, %v126, inf
    %v141 = vmin.f32 %v133, %v140
    %v142 = vmin.f32 %v135, %v137
    %v143 = vmin.f32 %v139, %v141
    %v144 = vmin.f32 %v142, %v143
    %v145 = vrot.slane %v144, 4
    %v146 = vmin.f32 %v144, %v145
    %v147 = vrot.slane %v146, 2
    %v148 = vmin.f32 %v146, %v147
    %v149 = vrot.slane %v148, 1
    %v150 = vmin.f32 %v148, %v149
    %v151 = vlaneseq
    %v152 = vshrl.u32 %v151, 7
    %v153 = vadd.s32 %v152, 8
    %v154 = vadd.s32 %v152, 16
    %v155 = vadd.s32 %v152, 24
    %v156 = vadd.s32 %v152, 32
    %v157 = vadd.s32 %v152, 40
    %v158 = vadd.s32 %v152, 48
    %v159 = vadd.s32 %v152, 56
    %vm160 = vcmp.eq.f32.partialorder %v99, %v150
    %vm161 = vcmp.eq.f32.partialorder %v102, %v150
    %vm162 = vcmp.eq.f32.partialorder %v107, %v150
    %vm163 = vcmp.eq.f32.partialorder %v110, %v150
    %vm164 = vcmp.eq.f32.partialorder %v115, %v150
    %vm165 = vcmp.eq.f32.partialorder %v118, %v150
    %vm166 = vcmp.eq.f32.partialorder %v123, %v150
    %vm167 = vcmp.eq.f32.partialorder %v126, %v150
    %v168 = vsel %vm160, %v152, 64
    %v169 = vsel %vm161, %v153, 64
    %v170 = vsel %vm162, %v154, 64
    %v171 = vsel %vm163, %v155, 64
    %v172 = vsel %vm164, %v156, 64
    %v173 = vsel %vm165, %v157, 64
    %v174 = vsel %vm166, %v158, 64
    %v175 = vsel %vm167, %v159, 64
    %v176 = vsel %vm129, %v168, 2147483647
    %v177 = vsel %vm129, %v169, 2147483647
    %v178 = vsel %vm129, %v170, 2147483647
    %v179 = vsel %vm129, %v171, 2147483647
    %v180 = vsel %vm129, %v172, 2147483647
    %vm181 = vcmp.lt.s32.totalorder %v176, %v180
    %v182 = vsel %vm181, %v176, %v180
    %v183 = vsel %vm129, %v173, 2147483647
    %vm184 = vcmp.lt.s32.totalorder %v177, %v183
    %v185 = vsel %vm184, %v177, %v183
    %v186 = vsel %vm129, %v174, 2147483647
    %vm187 = vcmp.lt.s32.totalorder %v178, %v186
    %v188 = vsel %vm187, %v178, %v186
    %v189 = vsel %vm129, %v175, 2147483647
    %vm190 = vcmp.lt.s32.totalorder %v179, %v189
    %v191 = vsel %vm190, %v179, %v189
    %vm192 = vcmp.lt.s32.totalorder %v182, %v185
    %v193 = vsel %vm192, %v182, %v185
    %vm194 = vcmp.lt.s32.totalorder %v188, %v191
    %v195 = vsel %vm194, %v188, %v191
    %vm196 = vcmp.lt.s32.totalorder %v193, %v195
    %v197 = vsel %vm196, %v193, %v195
    %v198 = vrot.slane %v197, 4
    %vm199 = vcmp.lt.s32.totalorder %v197, %v198
    %v200 = vsel %vm199, %v197, %v198
    %v201 = vrot.slane %v200, 2
    %vm202 = vcmp.lt.s32.totalorder %v200, %v201
    %v203 = vsel %vm202, %v200, %v201
    %v204 = vrot.slane %v203, 1
    %vm205 = vcmp.lt.s32.totalorder %v203, %v204
    %v206 = vsel %vm205, %v203, %v204
    %vm207 = vcmp.lt.f32.partialorder %v150, inf
    %v208 = vsel %vm207, %v206, 0
    %vm209 = vcmp.eq.s32.totalorder %v152, %v208
    %vm210 = vcmp.eq.s32.totalorder %v153, %v208
    %vm211 = vcmp.eq.s32.totalorder %v154, %v208
    %vm212 = vcmp.eq.s32.totalorder %v155, %v208
    %vm213 = vcmp.eq.s32.totalorder %v156, %v208
    %vm214 = vcmp.eq.s32.totalorder %v157, %v208
    %vm215 = vcmp.eq.s32.totalorder %v158, %v208
    %vm216 = vcmp.eq.s32.totalorder %v159, %v208
    %v217 = vsel %vm209, 1.0, 0.0
    %v218 = vsel %vm210, 1.0, 0.0
    %v219 = vsel %vm211, 1.0, 0.0
    %v220 = vsel %vm212, 1.0, 0.0
    %v221 = vsel %vm213, 1.0, 0.0
    %v222 = vsel %vm214, 1.0, 0.0
    %v223 = vsel %vm215, 1.0, 0.0
    %v224 = vsel %vm216, 1.0, 0.0
    %v225 = vld [vmem:[%s2] sm:$0xff]
    %v226 = vld [vmem:[%s2 + $0x8] sm:$0xff]
    %v227 = vld [vmem:[%s2 + $0x10] sm:$0xff]
    %v228 = vld [vmem:[%s2 + $0x18] sm:$0xff]
    %v229 = vld [vmem:[%s2 + $0x20] sm:$0xff]
    %v230 = vld [vmem:[%s2 + $0x28] sm:$0xff]
    %v231 = vld [vmem:[%s2 + $0x30] sm:$0xff]
    %v232 = vld [vmem:[%s2 + $0x38] sm:$0xff]
    %233 = vxpose.xlu0.b32.start [1/16] %v217, 128
    %234 = vxpose.xlu0.b32.cont [2/16] %v218, 128
    %235 = vxpose.xlu0.b32.cont [3/16] %v219, 128
    %236 = vxpose.xlu0.b32.cont [4/16] %v220, 128
    %237 = vxpose.xlu0.b32.cont [5/16] %v221, 128
    %238 = vxpose.xlu0.b32.cont [6/16] %v222, 128
    %239 = vxpose.xlu0.b32.cont [7/16] %v223, 128
    %240 = vxpose.xlu0.b32.cont [8/16] %v224, 128
    %241 = vxpose.xlu0.b32.cont [9/16] 0.0, 128
    %242 = vxpose.xlu0.b32.cont [10/16] 0.0, 128
    %243 = vxpose.xlu0.b32.cont [11/16] 0.0, 128
    %244 = vxpose.xlu0.b32.cont [12/16] 0.0, 128
    %245 = vxpose.xlu0.b32.cont [13/16] 0.0, 128
    %246 = vxpose.xlu0.b32.cont [14/16] 0.0, 128
    %247 = vxpose.xlu0.b32.cont [15/16] 0.0, 128
    %248 = vxpose.xlu0.b32.end [16/16] 0.0, 128
    %v249 = vpop.trf.xlu0
    %v250 = vpop.trf.xlu0
    %v251 = vpop.trf.xlu0
    %v252 = vpop.trf.xlu0
    %v253 = vpop.trf.xlu0
    %v254 = vpop.trf.xlu0
    %v255 = vpop.trf.xlu0
    %v256 = vpop.trf.xlu0
    %v257 = vpop.trf.xlu0
    %v258 = vpop.trf.xlu0
    %v259 = vpop.trf.xlu0
    %v260 = vpop.trf.xlu0
    %v261 = vpop.trf.xlu0
    %v262 = vpop.trf.xlu0
    %v263 = vpop.trf.xlu0
    %v264 = vpop.trf.xlu0
    %vm265 = vcmask 523264
    %v267 = vsel %vm265, %v249, 0
    %269 = vmatprep.subr.mxu0 0.0
    %270 = vmatpush1.msra.mxu0 %v225
    %271 = vmatprep.subr.mxu0 0.0
    %272 = vmatpush1.msra.mxu0 %v226
    %273 = vmatprep.subr.mxu0 0.0
    %274 = vmatpush1.msra.mxu0 %v227
    %275 = vmatprep.subr.mxu0 0.0
    %276 = vmatpush1.msra.mxu0 %v228
    %277 = vmatprep.subr.mxu0 0.0
    %278 = vmatpush1.msra.mxu0 %v229
    %279 = vmatprep.subr.mxu0 0.0
    %280 = vmatpush1.msra.mxu0 %v230
    %281 = vmatprep.subr.mxu0 0.0
    %282 = vmatpush1.msra.mxu0 %v231
    %283 = vmatprep.subr.mxu0 0.0
    %284 = vmatpush1.msra.mxu0 %v232
    %285 = vmatprep.subr.mxu0 0.0
    %286 = vmatpush1.msra.mxu0 0.0
    %287 = vmatprep.subr.mxu0 0.0
    %288 = vmatpush1.msra.mxu0 0.0
    %289 = vmatprep.subr.mxu0 0.0
    %290 = vmatpush1.msra.mxu0 0.0
    %291 = vmatprep.subr.mxu0 0.0
    %292 = vmatpush1.msra.mxu0 0.0
    %293 = vmatprep.subr.mxu0 0.0
    %294 = vmatpush1.msra.mxu0 0.0
    %295 = vmatprep.subr.mxu0 0.0
    %296 = vmatpush1.msra.mxu0 0.0
    %297 = vmatprep.subr.mxu0 0.0
    %298 = vmatpush1.msra.mxu0 0.0
    %299 = vmatprep.subr.mxu0 0.0
    %300 = vmatpush1.msra.mxu0 0.0
    %301 = vmatprep.subr.mxu0 0.0
    %302 = vmatpush1.msra.mxu0 0.0
    %303 = vmatprep.subr.mxu0 0.0
    %304 = vmatpush1.msra.mxu0 0.0
    %305 = vmatprep.subr.mxu0 0.0
    %306 = vmatpush1.msra.mxu0 0.0
    %307 = vmatprep.subr.mxu0 0.0
    %308 = vmatpush1.msra.mxu0 0.0
    %309 = vmatprep.subr.mxu0 0.0
    %310 = vmatpush1.msra.mxu0 0.0
    %311 = vmatprep.subr.mxu0 0.0
    %312 = vmatpush1.msra.mxu0 0.0
    %313 = vmatprep.subr.mxu0 0.0
    %314 = vmatpush1.msra.mxu0 0.0
    %315 = vmatprep.subr.mxu0 0.0
    %316 = vmatpush1.msra.mxu0 0.0
    %317 = vmatprep.subr.mxu0 0.0
    %318 = vmatpush1.msra.mxu0 0.0
    %319 = vmatprep.subr.mxu0 0.0
    %320 = vmatpush1.msra.mxu0 0.0
    %321 = vmatprep.subr.mxu0 0.0
    %322 = vmatpush1.msra.mxu0 0.0
    %323 = vmatprep.subr.mxu0 0.0
    %324 = vmatpush1.msra.mxu0 0.0
    %325 = vmatprep.subr.mxu0 0.0
    %326 = vmatpush1.msra.mxu0 0.0
    %327 = vmatprep.subr.mxu0 0.0
    %328 = vmatpush1.msra.mxu0 0.0
    %329 = vmatprep.subr.mxu0 0.0
    %330 = vmatpush1.msra.mxu0 0.0
    %331 = vmatprep.subr.mxu0 0.0
    %332 = vmatpush1.msra.mxu0 0.0
    %333 = vmatprep.mubr.f32.mxu0 0.0
    %334 = vmatmul.mubr.f32.gmra.mrb[0].mxu0 %v267
    %v335 = vpop.f32.mrb[0].mxu0
    %v336 = vadd.f32 0.0, %v335
    %v337 = vpop.f32.mrb[0].mxu0
    %338 = vdwg.mxu0
    %vm339 = vcmask 261120
    %340 = vst.msk [vmem:[#allocation2] sm:$0xff] %vm339, %v336
    %vm341 = vcmask 57344
    %342 = vst.msk [vmem:[#allocation4] sm:$0x1] %vm341, %v208
    // Predicated region
    $region14: #{tpu_custom_call.1} parent=1 // pred_check
      _
    $region15: #{tpu_custom_call.1} parent=1 // pred_check_branch
      %344 = sbr.rel (0) target = $region17
    $region16: #{tpu_custom_call.1} parent=1 // pred_region
      %s346 = ssub.s32 128, 128
      %347 = vsyncadd [#allocation3], %s346
      %s349 = sshll.u32 [#allocation2], 4
      %s350 = int_to_ptr.vmem [resolvable:$true] %s349
      %352 = dma.vmem_to_hbm [thread:$0]  %s350, 128, %s3, [#allocation3]
    $region17: #{tpu_custom_call.1} parent=1 // pred_fallthru
      _
    // Predicated region
    $region18: #{tpu_custom_call.1} parent=1 // pred_check
      _
    $region19: #{tpu_custom_call.1} parent=1 // pred_check_branch
      %354 = sbr.rel (0) target = $region21
    $region20: #{tpu_custom_call.1} parent=1 // pred_region
      %s356 = ssub.s32 16, 16
      %357 = vsyncadd [#allocation5], %s356
      %s359 = sshll.u32 [#allocation4], 4
      %s360 = int_to_ptr.vmem [resolvable:$true] %s359
      %362 = dma.vmem_to_hbm [thread:$0]  %s360, 16, %s4, [#allocation5]
    $region21: #{tpu_custom_call.1} parent=1 // pred_fallthru
      _
    // Predicated region
    $region22: #{tpu_custom_call.1} parent=1 // pred_check
      _
    $region23: #{tpu_custom_call.1} parent=1 // pred_check_branch
      %364 = sbr.rel (0) target = $region25
    $region24: #{tpu_custom_call.1} parent=1 // pred_region
      %365 = dma.done [#allocation3], 128
    $region25: #{tpu_custom_call.1} parent=1 // pred_fallthru
      _
    // Predicated region
    $region26: #{tpu_custom_call.1} parent=1 // pred_check
      _
    $region27: #{tpu_custom_call.1} parent=1 // pred_check_branch
      %367 = sbr.rel (0) target = $region29
    $region28: #{tpu_custom_call.1} parent=1 // pred_region
      %368 = dma.done [#allocation5], 16
    $region29: #{tpu_custom_call.1} parent=1 // pred_fallthru
      _
    %369 = vsyncpa [#allocation3], 1
    %370 = vsyncpa [#allocation5], 1

</llo_original>
